<compile_context>
chip_gen: v7x
topology: tpu7x:2x2x1
jax: 0.10.0
libtpu: 0.0.40
codegen_flags: <defaults>
</compile_context>

<pallas_src>
import jax
import jax.numpy as jnp
from jax.experimental import pallas as pl
from jax.experimental.pallas import tpu as pltpu


# ----------------------------- helpers ---------------------------------------

def _pick_q_tile(S, target=512):
    """Largest query-seq tile <= target that divides S and keeps (8,128) block rules."""
    if S <= target:
        return S
    for cand in range(target, 7, -1):
        if S % cand == 0 and cand % 8 == 0:
            return cand
    return S


def _default_vmem_limit():
    # Raise the scoped VMEM limit above the conservative defaults (16/32 MiB) while
    # leaving headroom below physical capacity (128 MiB v5e/v6e, 64 MiB v7x).
    try:
        cap = pltpu.get_tpu_info().vmem_capacity_bytes
    except Exception:
        cap = 64 * 1024 * 1024
    return min(96 * 1024 * 1024, (cap * 3) // 4)


def prepare_qk_weights(w_q, w_k, *, num_query_heads, num_kv_heads, head_dim,
                       dtype=jnp.bfloat16):
    """One-time prep (keep OUT of the hot path).

    PyTorch nn.Linear weights w_q: (Hq*D, H), w_k: (Hkv*D, H)  ->  fused per-KV-head
    weight blocks wqk: (Hkv, H, (expand+1)*D) where columns [e*D:(e+1)*D] are the
    e-th query head of that KV head and the last D columns are the KV head itself.
    """
    H = w_q.shape[1]
    expand = num_query_heads // num_kv_heads
    wq_h = w_q.reshape(num_query_heads, head_dim, H).transpose(0, 2, 1)   # (Hq, H, D)
    wk_h = w_k.reshape(num_kv_heads, head_dim, H).transpose(0, 2, 1)      # (Hkv, H, D)
    wq_g = wq_h.reshape(num_kv_heads, expand, H, head_dim)                # group by kv head
    wq_g = wq_g.transpose(0, 2, 1, 3).reshape(num_kv_heads, H, expand * head_dim)
    return jnp.concatenate([wq_g, wk_h], axis=-1).astype(dtype)           # (Hkv, H, (e+1)*D)


# ----------------------------- kernel -----------------------------------------

def _make_kernel(*, head_dim, expand, q_tile, n_q_tiles, cos_has_batch):
    D = head_dim

    def kernel(x_ref, wqk_ref, cos_ref, sin_ref, o_ref, q_scr, k_scr):
        qi = pl.program_id(2)

        # ---- Once per (batch, KV head): fused Q+K projection + RoPE -> VMEM scratch ----
        @pl.when(qi == 0)
        def _():
            x = x_ref[0]                     # (S, H)  bf16
            w = wqk_ref[0]                   # (H, (expand+1)*D)  bf16
            # Single MXU matmul covering all `expand` query heads + the KV head.
            qk = jnp.dot(x, w, preferred_element_type=jnp.float32)   # (S, (e+1)*D) f32

            cos = (cos_ref[0] if cos_has_batch else cos_ref[...]).astype(jnp.float32)
            sin = (sin_ref[0] if cos_has_batch else sin_ref[...]).astype(jnp.float32)

            if D % 128 == 0:
                # rotate_half(v) == roll(v, D//2, axis=-1) * sign; fold sign into sin
                # so RoPE is two VPU muls + one XLU roll (no concat / relayout copies).
                sign = jnp.where(
                    jax.lax.broadcasted_iota(jnp.int32, (1, D), 1) < (D // 2),
                    jnp.float32(-1.0), jnp.float32(1.0))
                sin_rot = sin * sign

                def rope(v):
                    return v * cos + pltpu.roll(v, shift=D // 2, axis=-1) * sin_rot
            else:
                # Toy / non-lane-aligned head_dim: fall back to the concat form.
                def rope(v):
                    half = D // 2
                    rot = jnp.concatenate([-v[..., half:], v[..., :half]], axis=-1)
                    return v * cos + rot * sin

            for e in range(expand):
                q_scr[e] = rope(qk[:, e * D:(e + 1) * D]).astype(jnp.bfloat16)
            k_scr[...] = rope(qk[:, expand * D:]).astype(jnp.bfloat16)

        # ---- Per query tile: scores + softmax for every query head of this KV head ----
        k = k_scr[...]                       # (S, D) bf16, computed once, reused
        for e in range(expand):
            if n_q_tiles == 1:
                q = q_scr[e]                 # (S, D) bf16
            else:
                start = pl.multiple_of(qi * q_tile, q_tile)
                q = q_scr[e, pl.ds(start, q_tile), :]        # (q_tile, D) bf16

            # q @ k^T (no 1/sqrt(d) scaling, per the original module), f32 accumulation.
            s = jax.lax.dot_general(q, k, (((1,), (1,)), ((), ())),
                                    preferred_element_type=jnp.float32)   # (q_tile, S)
            m = jnp.max(s, axis=-1, keepdims=True)
            p = jnp.exp(s - m)
            denom = jnp.sum(p, axis=-1, keepdims=True)
            w_attn = p * pl.reciprocal(denom, approx=True)   # EUP recip, VPU stays free
            o_ref[0, e, :, :] = w_attn.astype(o_ref.dtype)

    return kernel


# ----------------------------- wrapper -----------------------------------------

def llama_attn_weights_pallas(hidden_states, wqk, cos, sin, attn_mask=None, *,
                              num_query_heads, num_kv_heads, head_dim,
                              q_tile=None, out_dtype=jnp.float32):
    """hidden_states: (B, S, H); wqk from prepare_qk_weights (Hkv, H, (expand+1)*D);
    cos/sin: (S, D) batch-invariant table or (B, S, D).
    attn_mask is accepted for interface parity but UNUSED (as in the original forward).
    Returns attn_weights (B, Hq, S, S)."""
    del attn_mask  # unused by the original forward
    B, S, H = hidden_states.shape
    expand = num_query_heads // num_kv_heads
    fused = (expand + 1) * head_dim
    assert wqk.shape == (num_kv_heads, H, fused)

    if q_tile is None:
        q_tile = _pick_q_tile(S)
    assert S % q_tile == 0
    n_q = S // q_tile
    cos_has_batch = (cos.ndim == 3)

    # bf16 activations feed the MXU fast path (and halve x DMA bytes); all element-wise
    # math (RoPE, softmax) and matmul accumulation stay in f32 inside the kernel.
    x_bf16 = hidden_states.astype(jnp.bfloat16)

    kernel = _make_kernel(head_dim=head_dim, expand=expand, q_tile=q_tile,
                          n_q_tiles=n_q, cos_has_batch=cos_has_batch)

    if cos_has_batch:
        cos_spec = pl.BlockSpec((1, S, head_dim), lambda b, kh, qi: (b, 0, 0))
        sin_spec = pl.BlockSpec((1, S, head_dim), lambda b, kh, qi: (b, 0, 0))
    else:
        cos_spec = pl.BlockSpec((S, head_dim), lambda b, kh, qi: (0, 0))
        sin_spec = pl.BlockSpec((S, head_dim), lambda b, kh, qi: (0, 0))

    grid = (B, num_kv_heads, n_q)

    return pl.pallas_call(
        kernel,
        out_shape=jax.ShapeDtypeStruct((B, num_query_heads, S, S), out_dtype),
        grid_spec=pltpu.PrefetchScalarGridSpec(
            num_scalar_prefetch=0,
            grid=grid,
            in_specs=[
                # x block changes only with b -> DMA'd once per batch
                pl.BlockSpec((1, S, H), lambda b, kh, qi: (b, 0, 0)),
                # fused per-KV-head weight block (all expand q slices + the k slice)
                pl.BlockSpec((1, H, fused), lambda b, kh, qi: (kh, 0, 0)),
                cos_spec,
                sin_spec,
            ],
            # one output block covers the `expand` query heads of this KV head
            out_specs=pl.BlockSpec((1, expand, q_tile, S),
                                   lambda b, kh, qi: (b, kh, qi, 0)),
            scratch_shapes=[
                pltpu.VMEM((expand, S, head_dim), jnp.bfloat16),  # RoPE'd Q (all q heads)
                pltpu.VMEM((S, head_dim), jnp.bfloat16),          # RoPE'd K (once per kv head)
            ],
        ),
        compiler_params=pltpu.CompilerParams(
            # b / kv-head axes are independent (megacore-parallel on v7x); the query-tile
            # axis must stay sequential on one core so the Q/K scratch is reused.
            dimension_semantics=("parallel", "parallel", "arbitrary"),
            vmem_limit_bytes=_default_vmem_limit(),
        ),
    )(x_bf16, wqk, cos, sin)


# ----------------------------- reference + test --------------------------------

def _rotate_half(v):
    half = v.shape[-1] // 2
    return jnp.concatenate([-v[..., half:], v[..., :half]], axis=-1)


def reference_jax(x, w_q, w_k, cos, sin, *, num_query_heads, num_kv_heads, head_dim):
    """Pure-JAX (all-f32) mirror of the PyTorch forward. cos/sin: (B, S, D)."""
    B, S, H = x.shape
    q = x @ w_q.T
    k = x @ w_k.T
    q = q.reshape(B, S, num_query_heads, head_dim).transpose(0, 2, 1, 3)
    k = k.reshape(B, S, num_kv_heads, head_dim).transpose(0, 2, 1, 3)
    cos_b = cos[:, None, :, :]
    sin_b = sin[:, None, :, :]
    q = q * cos_b + _rotate_half(q) * sin_b
    k = k * cos_b + _rotate_half(k) * sin_b
    k = jnp.repeat(k, num_query_heads // num_kv_heads, axis=1)
    s = jnp.einsum('bhqd,bhkd->bhqk', q, k)
    return jax.nn.softmax(s, axis=-1)


if __name__ == "__main__":
    # Small shapes consistent with the module.
    B, S, H = 2, 8, 32
    head_dim = 8
    num_query_heads = 4          # q_proj.out_features = 32
    num_kv_heads = 2             # k_proj.out_features = 16

    key = jax.random.PRNGKey(0)
    k_x, k_wq, k_wk = jax.random.split(key, 3)

    hidden_states = jax.random.normal(k_x, (B, S, H), dtype=jnp.float32)
    # PyTorch nn.Linear weight layout: (out_features, in_features); bias=False (Llama).
    w_q = jax.random.normal(k_wq, (num_query_heads * head_dim, H), dtype=jnp.float32) * 0.05
    w_k = jax.random.normal(k_wk, (num_kv_heads * head_dim, H), dtype=jnp.float32) * 0.05

    # Deterministic rotary embeddings (standard Llama construction), batch-invariant (S, D).
    inv_freq = 1.0 / (10000.0 ** (jnp.arange(0, head_dim, 2, dtype=jnp.float32) / head_dim))
    pos = jnp.arange(S, dtype=jnp.float32)
    freqs = pos[:, None] * inv_freq[None, :]                      # (S, D/2)
    emb = jnp.concatenate([freqs, freqs], axis=-1)                # (S, D)
    cos = jnp.cos(emb).astype(jnp.float32)                        # (S, D)
    sin = jnp.sin(emb).astype(jnp.float32)

    # One-time weight regrouping (outside the hot path), fused per KV head, bf16.
    wqk = prepare_qk_weights(w_q, w_k, num_query_heads=num_query_heads,
                             num_kv_heads=num_kv_heads, head_dim=head_dim)

    # attn_mask is accepted but unused by the original forward -> pass None.
    out = llama_attn_weights_pallas(
        hidden_states, wqk, cos, sin, attn_mask=None,
        num_query_heads=num_query_heads, num_kv_heads=num_kv_heads, head_dim=head_dim)
    out = jax.block_until_ready(out)

    cos_b = jnp.broadcast_to(cos[None], (B, S, head_dim))
    sin_b = jnp.broadcast_to(sin[None], (B, S, head_dim))
    ref = reference_jax(hidden_states, w_q, w_k, cos_b, sin_b,
                        num_query_heads=num_query_heads,
                        num_kv_heads=num_kv_heads, head_dim=head_dim)

    assert out.shape == (B, num_query_heads, S, S)
    # bf16 MXU inputs (+ approx reciprocal) vs an all-f32 reference: loosened tolerance.
    assert jnp.allclose(out, ref, atol=2e-2, rtol=2e-2), (
        f"mismatch vs reference, max abs err={jnp.max(jnp.abs(out - ref))}")
    print("KERNEL_OK")
</pallas_src>

<mosaic_0001>
module attributes {stable_mosaic.version = 11 : i64} {
  func.func @kernel(%arg0: i32, %arg1: i32, %arg2: i32, %arg3: memref<1x8x32xbf16, #tpu.memory_space<vmem>>, %arg4: memref<1x32x24xbf16, #tpu.memory_space<vmem>>, %arg5: memref<8x8xf32, #tpu.memory_space<vmem>>, %arg6: memref<8x8xf32, #tpu.memory_space<vmem>>, %arg7: memref<1x2x8x8xf32, #tpu.memory_space<vmem>>, %arg8: memref<2x8x8xbf16, #tpu.memory_space<vmem>>, %arg9: memref<8x8xbf16, #tpu.memory_space<vmem>>) attributes {dimension_semantics = [#tpu.dimension_semantics<parallel>, #tpu.dimension_semantics<parallel>, #tpu.dimension_semantics<arbitrary>], iteration_bounds = array<i64: 2, 2, 1>, scalar_prefetch = 0 : i64, scratch_operands = 2 : i64, tpu.core_type = #tpu.core_type<tc>, window_params = [{transform_indices = @transform_0, window_bounds = array<i64: 1, 8, 32>}, {transform_indices = @transform_1, window_bounds = array<i64: 1, 32, 24>}, {pipeline_mode = #tpu.pipeline_mode<synchronous>, transform_indices = @transform_2, window_bounds = array<i64: 8, 8>}, {pipeline_mode = #tpu.pipeline_mode<synchronous>, transform_indices = @transform_3, window_bounds = array<i64: 8, 8>}, {transform_indices = @transform_4, window_bounds = array<i64: 1, 2, 8, 8>}]} {
    %c0_i32 = arith.constant 0 : i32
    %0 = arith.cmpi eq, %arg2, %c0_i32 : i32
    %1 = arith.extui %0 : i1 to i32
    %c0_i32_0 = arith.constant 0 : i32
    %2 = arith.cmpi ne, %1, %c0_i32_0 : i32
    scf.if %2 {
      %c0_20 = arith.constant 0 : index
      %c0_21 = arith.constant 0 : index
      %c0_22 = arith.constant 0 : index
      %36 = vector.load %arg3[%c0_20, %c0_21, %c0_22] : memref<1x8x32xbf16, #tpu.memory_space<vmem>>, vector<1x8x32xbf16>
      %37 = vector.shape_cast %36 : vector<1x8x32xbf16> to vector<8x32xbf16>
      %c0_23 = arith.constant 0 : index
      %c0_24 = arith.constant 0 : index
      %c0_25 = arith.constant 0 : index
      %38 = vector.load %arg4[%c0_23, %c0_24, %c0_25] : memref<1x32x24xbf16, #tpu.memory_space<vmem>>, vector<1x32x24xbf16>
      %39 = vector.shape_cast %38 : vector<1x32x24xbf16> to vector<32x24xbf16>
      %cst_26 = arith.constant dense<0.000000e+00> : vector<8x24xf32>
      %40 = tpu.matmul %37, %39, %cst_26 {dimension_numbers = #tpu.dot_dimension_numbers<[1], [0], [0], [1], [0, 0, 1, 1], [], []>} : vector<8x32xbf16>, vector<32x24xbf16>, vector<8x24xf32> -> vector<8x24xf32>
      %c0_27 = arith.constant 0 : index
      %c0_28 = arith.constant 0 : index
      %41 = vector.load %arg5[%c0_27, %c0_28] : memref<8x8xf32, #tpu.memory_space<vmem>>, vector<8x8xf32>
      %c0_29 = arith.constant 0 : index
      %c0_30 = arith.constant 0 : index
      %42 = vector.load %arg6[%c0_29, %c0_30] : memref<8x8xf32, #tpu.memory_space<vmem>>, vector<8x8xf32>
      %43 = vector.extract_strided_slice %40 {offsets = [0, 0], sizes = [8, 8], strides = [1, 1]} : vector<8x24xf32> to vector<8x8xf32>
      %44 = vector.extract_strided_slice %43 {offsets = [0, 4], sizes = [8, 4], strides = [1, 1]} : vector<8x8xf32> to vector<8x4xf32>
      %cst_31 = arith.constant 0.000000e+00 : f32
      %45 = vector.broadcast %cst_31 : f32 to vector<8x4xf32>
      %46 = arith.subf %45, %44 : vector<8x4xf32>
      %47 = vector.extract_strided_slice %43 {offsets = [0, 0], sizes = [8, 4], strides = [1, 1]} : vector<8x8xf32> to vector<8x4xf32>
      %48 = tpu.concatenate %46, %47 in 1 : vector<8x4xf32>, vector<8x4xf32> -> vector<8x8xf32>
      %49 = arith.mulf %43, %41 : vector<8x8xf32>
      %50 = arith.mulf %48, %42 : vector<8x8xf32>
      %51 = arith.addf %49, %50 : vector<8x8xf32>
      %52 = arith.truncf %51 : vector<8x8xf32> to vector<8x8xbf16>
      %c0_32 = arith.constant 0 : index
      %c0_33 = arith.constant 0 : index
      %c0_34 = arith.constant 0 : index
      %53 = vector.load %arg8[%c0_32, %c0_33, %c0_34] : memref<2x8x8xbf16, #tpu.memory_space<vmem>>, vector<1x8x8xbf16>
      %54 = vector.shape_cast %53 : vector<1x8x8xbf16> to vector<8x8xbf16>
      %55 = vector.shape_cast %52 : vector<8x8xbf16> to vector<1x8x8xbf16>
      tpu.vector_store %arg8[%c0_32, %c0_33, %c0_34], %55 {strides = array<i32>} : memref<2x8x8xbf16, #tpu.memory_space<vmem>>, vector<1x8x8xbf16>,
      %56 = vector.extract_strided_slice %40 {offsets = [0, 8], sizes = [8, 8], strides = [1, 1]} : vector<8x24xf32> to vector<8x8xf32>
      %57 = vector.extract_strided_slice %56 {offsets = [0, 4], sizes = [8, 4], strides = [1, 1]} : vector<8x8xf32> to vector<8x4xf32>
      %cst_35 = arith.constant 0.000000e+00 : f32
      %58 = vector.broadcast %cst_35 : f32 to vector<8x4xf32>
      %59 = arith.subf %58, %57 : vector<8x4xf32>
      %60 = vector.extract_strided_slice %56 {offsets = [0, 0], sizes = [8, 4], strides = [1, 1]} : vector<8x8xf32> to vector<8x4xf32>
      %61 = tpu.concatenate %59, %60 in 1 : vector<8x4xf32>, vector<8x4xf32> -> vector<8x8xf32>
      %62 = arith.mulf %56, %41 : vector<8x8xf32>
      %63 = arith.mulf %61, %42 : vector<8x8xf32>
      %64 = arith.addf %62, %63 : vector<8x8xf32>
      %65 = arith.truncf %64 : vector<8x8xf32> to vector<8x8xbf16>
      %c1_36 = arith.constant 1 : index
      %c0_37 = arith.constant 0 : index
      %c0_38 = arith.constant 0 : index
      %66 = vector.load %arg8[%c1_36, %c0_37, %c0_38] : memref<2x8x8xbf16, #tpu.memory_space<vmem>>, vector<1x8x8xbf16>
      %67 = vector.shape_cast %66 : vector<1x8x8xbf16> to vector<8x8xbf16>
      %68 = vector.shape_cast %65 : vector<8x8xbf16> to vector<1x8x8xbf16>
      tpu.vector_store %arg8[%c1_36, %c0_37, %c0_38], %68 {strides = array<i32>} : memref<2x8x8xbf16, #tpu.memory_space<vmem>>, vector<1x8x8xbf16>,
      %69 = vector.extract_strided_slice %40 {offsets = [0, 16], sizes = [8, 8], strides = [1, 1]} : vector<8x24xf32> to vector<8x8xf32>
      %70 = vector.extract_strided_slice %69 {offsets = [0, 4], sizes = [8, 4], strides = [1, 1]} : vector<8x8xf32> to vector<8x4xf32>
      %cst_39 = arith.constant 0.000000e+00 : f32
      %71 = vector.broadcast %cst_39 : f32 to vector<8x4xf32>
      %72 = arith.subf %71, %70 : vector<8x4xf32>
      %73 = vector.extract_strided_slice %69 {offsets = [0, 0], sizes = [8, 4], strides = [1, 1]} : vector<8x8xf32> to vector<8x4xf32>
      %74 = tpu.concatenate %72, %73 in 1 : vector<8x4xf32>, vector<8x4xf32> -> vector<8x8xf32>
      %75 = arith.mulf %69, %41 : vector<8x8xf32>
      %76 = arith.mulf %74, %42 : vector<8x8xf32>
      %77 = arith.addf %75, %76 : vector<8x8xf32>
      %78 = arith.truncf %77 : vector<8x8xf32> to vector<8x8xbf16>
      %c0_40 = arith.constant 0 : index
      %c0_41 = arith.constant 0 : index
      %79 = vector.load %arg9[%c0_40, %c0_41] : memref<8x8xbf16, #tpu.memory_space<vmem>>, vector<8x8xbf16>
      tpu.vector_store %arg9[%c0_40, %c0_41], %78 {strides = array<i32>} : memref<8x8xbf16, #tpu.memory_space<vmem>>, vector<8x8xbf16>,
    } else {
    }
    %c0 = arith.constant 0 : index
    %c0_1 = arith.constant 0 : index
    %3 = vector.load %arg9[%c0, %c0_1] : memref<8x8xbf16, #tpu.memory_space<vmem>>, vector<8x8xbf16>
    %c0_2 = arith.constant 0 : index
    %c0_3 = arith.constant 0 : index
    %c0_4 = arith.constant 0 : index
    %4 = vector.load %arg8[%c0_2, %c0_3, %c0_4] : memref<2x8x8xbf16, #tpu.memory_space<vmem>>, vector<1x8x8xbf16>
    %5 = vector.shape_cast %4 : vector<1x8x8xbf16> to vector<8x8xbf16>
    %cst = arith.constant dense<0.000000e+00> : vector<8x8xf32>
    %6 = tpu.matmul %5, %3, %cst {dimension_numbers = #tpu.dot_dimension_numbers<[1], [1], [0], [0], [0, 0, 1, 0], [], []>} : vector<8x8xbf16>, vector<8x8xbf16>, vector<8x8xf32> -> vector<8x8xf32>
    %cst_5 = arith.constant dense<0xFF800000> : vector<8xf32>
    %7 = vector.multi_reduction <maximumf>, %6, %cst_5 [1] : vector<8x8xf32> to vector<8xf32>
    %8 = vector.shape_cast %7 : vector<8xf32> to vector<8x1xf32>
    %9 = vector.broadcast %8 : vector<8x1xf32> to vector<8x8xf32>
    %10 = arith.subf %6, %9 : vector<8x8xf32>
    %11 = math.exp %10 : vector<8x8xf32>
    %cst_6 = arith.constant dense<0.000000e+00> : vector<8xf32>
    %12 = vector.multi_reduction <add>, %11, %cst_6 [1] : vector<8x8xf32> to vector<8xf32>
    %13 = vector.shape_cast %12 : vector<8xf32> to vector<8x1xf32>
    %14 = tpu.reciprocal %13 {approx = true} : vector<8x1xf32> -> vector<8x1xf32>
    %15 = vector.broadcast %14 : vector<8x1xf32> to vector<8x8xf32>
    %16 = arith.mulf %11, %15 : vector<8x8xf32>
    %c0_7 = arith.constant 0 : index
    %c0_8 = arith.constant 0 : index
    %c0_9 = arith.constant 0 : index
    %c0_10 = arith.constant 0 : index
    %17 = vector.load %arg7[%c0_7, %c0_8, %c0_9, %c0_10] : memref<1x2x8x8xf32, #tpu.memory_space<vmem>>, vector<1x1x8x8xf32>
    %18 = vector.shape_cast %17 : vector<1x1x8x8xf32> to vector<8x8xf32>
    %19 = vector.shape_cast %16 : vector<8x8xf32> to vector<1x1x8x8xf32>
    tpu.vector_store %arg7[%c0_7, %c0_8, %c0_9, %c0_10], %19 {strides = array<i32>} : memref<1x2x8x8xf32, #tpu.memory_space<vmem>>, vector<1x1x8x8xf32>,
    %c1 = arith.constant 1 : index
    %c0_11 = arith.constant 0 : index
    %c0_12 = arith.constant 0 : index
    %20 = vector.load %arg8[%c1, %c0_11, %c0_12] : memref<2x8x8xbf16, #tpu.memory_space<vmem>>, vector<1x8x8xbf16>
    %21 = vector.shape_cast %20 : vector<1x8x8xbf16> to vector<8x8xbf16>
    %cst_13 = arith.constant dense<0.000000e+00> : vector<8x8xf32>
    %22 = tpu.matmul %21, %3, %cst_13 {dimension_numbers = #tpu.dot_dimension_numbers<[1], [1], [0], [0], [0, 0, 1, 0], [], []>} : vector<8x8xbf16>, vector<8x8xbf16>, vector<8x8xf32> -> vector<8x8xf32>
    %cst_14 = arith.constant dense<0xFF800000> : vector<8xf32>
    %23 = vector.multi_reduction <maximumf>, %22, %cst_14 [1] : vector<8x8xf32> to vector<8xf32>
    %24 = vector.shape_cast %23 : vector<8xf32> to vector<8x1xf32>
    %25 = vector.broadcast %24 : vector<8x1xf32> to vector<8x8xf32>
    %26 = arith.subf %22, %25 : vector<8x8xf32>
    %27 = math.exp %26 : vector<8x8xf32>
    %cst_15 = arith.constant dense<0.000000e+00> : vector<8xf32>
    %28 = vector.multi_reduction <add>, %27, %cst_15 [1] : vector<8x8xf32> to vector<8xf32>
    %29 = vector.shape_cast %28 : vector<8xf32> to vector<8x1xf32>
    %30 = tpu.reciprocal %29 {approx = true} : vector<8x1xf32> -> vector<8x1xf32>
    %31 = vector.broadcast %30 : vector<8x1xf32> to vector<8x8xf32>
    %32 = arith.mulf %27, %31 : vector<8x8xf32>
    %c0_16 = arith.constant 0 : index
    %c1_17 = arith.constant 1 : index
    %c0_18 = arith.constant 0 : index
    %c0_19 = arith.constant 0 : index
    %33 = vector.load %arg7[%c0_16, %c1_17, %c0_18, %c0_19] : memref<1x2x8x8xf32, #tpu.memory_space<vmem>>, vector<1x1x8x8xf32>
    %34 = vector.shape_cast %33 : vector<1x1x8x8xf32> to vector<8x8xf32>
    %35 = vector.shape_cast %32 : vector<8x8xf32> to vector<1x1x8x8xf32>
    tpu.vector_store %arg7[%c0_16, %c1_17, %c0_18, %c0_19], %35 {strides = array<i32>} : memref<1x2x8x8xf32, #tpu.memory_space<vmem>>, vector<1x1x8x8xf32>,
    return
  }
  func.func @transform_0(%arg0: i32, %arg1: i32, %arg2: i32) -> (i32, i32, i32) {
    %c0_i32 = arith.constant 0 : i32
    %c0_i32_0 = arith.constant 0 : i32
    %c0_i32_1 = arith.constant 0 : i32
    return %arg0, %c0_i32, %c0_i32_0 : i32, i32, i32
  }
  func.func @transform_1(%arg0: i32, %arg1: i32, %arg2: i32) -> (i32, i32, i32) {
    %c0_i32 = arith.constant 0 : i32
    %c0_i32_0 = arith.constant 0 : i32
    %c0_i32_1 = arith.constant 0 : i32
    return %arg1, %c0_i32, %c0_i32_0 : i32, i32, i32
  }
  func.func @transform_2(%arg0: i32, %arg1: i32, %arg2: i32) -> (i32, i32) {
    %c0_i32 = arith.constant 0 : i32
    %c0_i32_0 = arith.constant 0 : i32
    %c0_i32_1 = arith.constant 0 : i32
    return %c0_i32, %c0_i32_0 : i32, i32
  }
  func.func @transform_3(%arg0: i32, %arg1: i32, %arg2: i32) -> (i32, i32) {
    %c0_i32 = arith.constant 0 : i32
    %c0_i32_0 = arith.constant 0 : i32
    %c0_i32_1 = arith.constant 0 : i32
    return %c0_i32, %c0_i32_0 : i32, i32
  }
  func.func @transform_4(%arg0: i32, %arg1: i32, %arg2: i32) -> (i32, i32, i32, i32) {
    %c0_i32 = arith.constant 0 : i32
    %c0_i32_0 = arith.constant 0 : i32
    return %arg0, %arg1, %arg2, %c0_i32 : i32, i32, i32, i32
  }
}

</mosaic_0001>

<llo_original>
// kernel: tpu_custom_call.1
$region0: #{tpu_custom_call.1}
  #allocation0 [shape = 'u32[]', space=smem, size = 0x4, offset = 0x4, fixed_abs, tag = 'smem constant byte address 0x4 - core index']
  #allocation1 [shape = 'u32[144,128]{1,0:T(1,128)}', space=vmem, size = 0x12000, scoped, tag = 'internal scratch']
  #allocation2 [shape = 'bf16[2,8,8]{2,1,0:T(8,128)(2,1)}', space=vmem, size = 0x1000, scoped, tag = 'scratch operand']
  #allocation3 [shape = 'bf16[8,8]{1,0:T(8,128)(2,1)}', space=vmem, size = 0x800, scoped, tag = 'scratch operand']
  %s0 = inlined_call_operand.vmem [shape: bf16[2,8,32], index: 0, kind: input, shape index: {}]
  %s1 = inlined_call_operand.vmem [shape: bf16[2,32,24], index: 1, kind: input, shape index: {}]
  %s2 = inlined_call_operand.vmem [shape: f32[8,8], index: 2, kind: input, shape index: {}]
  %s3 = inlined_call_operand.vmem [shape: f32[8,8], index: 3, kind: input, shape index: {}]
  %s4 = inlined_call_operand.hbm [shape: f32[2,4,8,8], index: 4, kind: output, shape index: {}]
  %s5 = sld [smem:[#allocation0]]
  $region53: #{tpu_custom_call.1} parent=0
    _
  %s7 = ssub.s32 1, %s5
  %s8 = scalar_select 0, %s7, %s5
  $region1: #{tpu_custom_call.1} parent=0
    #allocation4 [shape = 'u8[16384]{0}', space=vmem, size = 0x4000, scoped, tag = 'output window, operand 0']
    #allocation5 [shape = 's32[2]{0}', space=sflag, size = 0x8, scoped, tag = 'scoped memory for tpu_custom_call.1']
    %9 = vsyncpa [#allocation5], 0
    %s10 = scalar_lea.sflag [#allocation5], 1
    %11 = vsyncpa %s10, 0
    loop: start=0, step=1, limit=6
    $region2: #{tpu_custom_call.1} parent=1 // loop_pre_header
      _
    $region3: #{tpu_custom_call.1} parent=1 // loop_header
      %s13 = sphi 0, %s17
      %p14 = scmp.ge.s32.totalorder %s13, 6
      %s20 = sphi 0, %s39
      %s21 = sphi 0, %s35
      %s22 = sphi 0, %s31
      %s23 = sphi 0, %s20
      %s24 = sphi 0, %s21
      %s25 = sphi 0, %s22
      %s26 = sphi 0, %s23
      %s27 = sphi 0, %s24
      %s28 = sphi 0, %s25
      %s42 = sphi 0, %s44
      %s45 = sphi 0, %s42
      %s46 = sphi 0, %s45
      %s62 = sphi 0, %s46
      %s68 = sphi 0, %s70
      %s71 = sphi 0, %s68
      %s72 = sphi 0, %s71
      %s88 = sphi 0, %s72
      %s92 = sphi 0, %s92
      %s94 = sphi 0, %s92
      %s95 = sphi 0, %s94
      %s109 = sphi 0, %s95
      %s113 = sphi 0, %s113
      %s115 = sphi 0, %s113
      %s116 = sphi 0, %s115
      %s130 = sphi 0, %s116
      %s140 = sphi 0, %s142
      %s143 = sphi 0, %s140
      %s144 = sphi 0, %s143
      %s160 = sphi 0, %s144
    $region4: #{tpu_custom_call.1} parent=1 // loop_header_branch
      %16 = sbr.rel (%p14) target = $region8
    $region5: #{tpu_custom_call.1} parent=1 // loop_body
      %s18 = ssub.s32 %s13, 1
      %s19 = ssub.s32 %s13, 2
      %s29 = sadd.s32 1, %s22
      %p30 = scmp.ge.s32.totalorder %s29, 1
      %s31 = scalar_select %p30, 0, %s29
      %s32 = sadd.s32 1, %s21
      %s33 = scalar_select %p30, %s32, %s21
      %p34 = scmp.ge.s32.totalorder %s33, 2
      %s35 = scalar_select %p34, 0, %s33
      %s36 = sadd.s32 1, %s20
      %s37 = scalar_select %p34, %s36, %s20
      %p38 = scmp.ge.s32.totalorder %s37, 2
      %s39 = scalar_select %p38, 0, %s37
      %s40 = ssub.s32 %s20, %s39
      %p41 = scmp.eq.s32.totalorder %s40, 0
      %s43 = sadd.s32 %s42, 1
      %s44 = scalar_select %p41, %s42, %s43
      %p47 = pneg %p41
      %p48 = scmp.eq.s32.totalorder %s13, 3
      %p49 = por %p47, %p48
      %p50 = scmp.ne.s32.totalorder %s42, %s45
      %p51 = scmp.eq.s32.totalorder %s13, 0
      %p52 = por %p50, %p51
      %p53 = scmp.ne.s32.totalorder %s42, %s45
      %p54 = scmp.eq.s32.totalorder %s18, 3
      %p55 = por %p53, %p54
      %p56 = scmp.ne.s32.totalorder %s45, %s46
      %p57 = scmp.eq.s32.totalorder %s18, 0
      %p58 = por %p56, %p57
      %p59 = scmp.ne.s32.totalorder %s45, %s46
      %p60 = scmp.eq.s32.totalorder %s19, 3
      %p61 = por %p59, %p60
      %p63 = scmp.ne.s32.totalorder %s46, %s62
      %p64 = scmp.eq.s32.totalorder %s19, 0
      %p65 = por %p63, %p64
      %s66 = ssub.s32 %s21, %s35
      %p67 = scmp.eq.s32.totalorder %s66, 0
      %s69 = sadd.s32 %s68, 1
      %s70 = scalar_select %p67, %s68, %s69
      %p73 = pneg %p67
      %p74 = scmp.eq.s32.totalorder %s13, 3
      %p75 = por %p73, %p74
      %p76 = scmp.ne.s32.totalorder %s68, %s71
      %p77 = scmp.eq.s32.totalorder %s13, 0
      %p78 = por %p76, %p77
      %p79 = scmp.ne.s32.totalorder %s68, %s71
      %p80 = scmp.eq.s32.totalorder %s18, 3
      %p81 = por %p79, %p80
      %p82 = scmp.ne.s32.totalorder %s71, %s72
      %p83 = scmp.eq.s32.totalorder %s18, 0
      %p84 = por %p82, %p83
      %p85 = scmp.ne.s32.totalorder %s71, %s72
      %p86 = scmp.eq.s32.totalorder %s19, 3
      %p87 = por %p85, %p86
      %p89 = scmp.ne.s32.totalorder %s72, %s88
      %p90 = scmp.eq.s32.totalorder %s19, 0
      %p91 = por %p89, %p90
      %s93 = sadd.s32 %s92, 1
      %p96 = scmp.eq.s32.totalorder %s13, 3
      %p97 = scmp.ne.s32.totalorder %s92, %s94
      %p98 = scmp.eq.s32.totalorder %s13, 0
      %p99 = por %p97, %p98
      %p100 = scmp.ne.s32.totalorder %s92, %s94
      %p101 = scmp.eq.s32.totalorder %s18, 3
      %p102 = por %p100, %p101
      %p103 = scmp.ne.s32.totalorder %s94, %s95
      %p104 = scmp.eq.s32.totalorder %s18, 0
      %p105 = por %p103, %p104
      %p106 = scmp.ne.s32.totalorder %s94, %s95
      %p107 = scmp.eq.s32.totalorder %s19, 3
      %p108 = por %p106, %p107
      %p110 = scmp.ne.s32.totalorder %s95, %s109
      %p111 = scmp.eq.s32.totalorder %s19, 0
      %p112 = por %p110, %p111
      %s114 = sadd.s32 %s113, 1
      %p117 = scmp.eq.s32.totalorder %s13, 3
      %p118 = scmp.ne.s32.totalorder %s113, %s115
      %p119 = scmp.eq.s32.totalorder %s13, 0
      %p120 = por %p118, %p119
      %p121 = scmp.ne.s32.totalorder %s113, %s115
      %p122 = scmp.eq.s32.totalorder %s18, 3
      %p123 = por %p121, %p122
      %p124 = scmp.ne.s32.totalorder %s115, %s116
      %p125 = scmp.eq.s32.totalorder %s18, 0
      %p126 = por %p124, %p125
      %p127 = scmp.ne.s32.totalorder %s115, %s116
      %p128 = scmp.eq.s32.totalorder %s19, 3
      %p129 = por %p127, %p128
      %p131 = scmp.ne.s32.totalorder %s116, %s130
      %p132 = scmp.eq.s32.totalorder %s19, 0
      %p133 = por %p131, %p132
      %s134 = ssub.s32 %s20, %s39
      %s135 = ssub.s32 %s21, %s35
      %s136 = sor.u32 %s134, %s135
      %s137 = ssub.s32 %s22, %s31
      %s138 = sor.u32 %s136, %s137
      %p139 = scmp.eq.s32.totalorder %s138, 0
      %s141 = sadd.s32 %s140, 1
      %s142 = scalar_select %p139, %s140, %s141
      %p145 = pneg %p139
      %p146 = scmp.eq.s32.totalorder %s13, 3
      %p147 = por %p145, %p146
      %p148 = scmp.ne.s32.totalorder %s140, %s143
      %p149 = scmp.eq.s32.totalorder %s13, 0
      %p150 = por %p148, %p149
      %p151 = scmp.ne.s32.totalorder %s140, %s143
      %p152 = scmp.eq.s32.totalorder %s18, 3
      %p153 = por %p151, %p152
      %p154 = scmp.ne.s32.totalorder %s143, %s144
      %p155 = scmp.eq.s32.totalorder %s18, 0
      %p156 = por %p154, %p155
      %p157 = scmp.ne.s32.totalorder %s143, %s144
      %p158 = scmp.eq.s32.totalorder %s19, 3
      %p159 = por %p157, %p158
      %p161 = scmp.ne.s32.totalorder %s144, %s160
      %p162 = scmp.eq.s32.totalorder %s19, 0
      %p163 = por %p161, %p162
      %p164 = scmp.le.s32.totalorder 1, %s13
      %p165 = scmp.lt.s32.totalorder %s13, 5
      %p166 = pnand %p164, %p165
      %p167 = pneg %p166
      // Predicated region
      $region9: #{tpu_custom_call.1} parent=5 // pred_check
        _
      $region10: #{tpu_custom_call.1} parent=5 // pred_check_branch
        %169 = sbr.rel (%p166) target = $region12
      $region11: #{tpu_custom_call.1} parent=5 // pred_region
        %s170 = ssub.s32 %s13, 1
        // Predicated region
        $region13: #{tpu_custom_call.1} parent=11 // pred_check
          %p171 = pneg %p105
        $region14: #{tpu_custom_call.1} parent=11 // pred_check_branch
          %173 = sbr.rel (%p171) target = $region16
        $region15: #{tpu_custom_call.1} parent=11 // pred_region
          _
        $region16: #{tpu_custom_call.1} parent=11 // pred_fallthru
          _
        // Predicated region
        $region17: #{tpu_custom_call.1} parent=11 // pred_check
          %p174 = pneg %p126
        $region18: #{tpu_custom_call.1} parent=11 // pred_check_branch
          %176 = sbr.rel (%p174) target = $region20
        $region19: #{tpu_custom_call.1} parent=11 // pred_region
          _
        $region20: #{tpu_custom_call.1} parent=11 // pred_fallthru
          _
      $region12: #{tpu_custom_call.1} parent=5 // pred_fallthru
        _
      %p177 = scmp.lt.s32.totalorder %s13, 4
      // Predicated region
      $region21: #{tpu_custom_call.1} parent=5 // pred_check
        %p178 = pneg %p177
      $region22: #{tpu_custom_call.1} parent=5 // pred_check_branch
        %180 = sbr.rel (%p178) target = $region24
      $region23: #{tpu_custom_call.1} parent=5 // pred_region
        // Predicated region
        $region25: #{tpu_custom_call.1} parent=23 // pred_check
          %p181 = pneg %p52
        $region26: #{tpu_custom_call.1} parent=23 // pred_check_branch
          %183 = sbr.rel (%p181) target = $region28
        $region27: #{tpu_custom_call.1} parent=23 // pred_region
          %p184 = scmp.lt.s32.totalorder %s20, 1
          %s185 = scalar_select %p184, %s20, 1
          %s186 = smul.addr %s185, 4
          %s187 = scalar_lea.vmem %s0, %s186
        $region28: #{tpu_custom_call.1} parent=23 // pred_fallthru
          _
        // Predicated region
        $region29: #{tpu_custom_call.1} parent=23 // pred_check
          %p188 = pneg %p78
        $region30: #{tpu_custom_call.1} parent=23 // pred_check_branch
          %190 = sbr.rel (%p188) target = $region32
        $region31: #{tpu_custom_call.1} parent=23 // pred_region
          %p191 = scmp.lt.s32.totalorder %s21, 1
          %s192 = scalar_select %p191, %s21, 1
          %s193 = smul.addr %s192, 4
          %s194 = smul.addr %s193, 4
          %s195 = scalar_lea.vmem %s1, %s194
        $region32: #{tpu_custom_call.1} parent=23 // pred_fallthru
          _
      $region24: #{tpu_custom_call.1} parent=5 // pred_fallthru
        _
      %p196 = scmp.le.s32.totalorder 1, %s13
      %p197 = scmp.lt.s32.totalorder %s13, 5
      %p198 = pnand %p196, %p197
      %p199 = pneg %p198
      // Predicated region
      $region33: #{tpu_custom_call.1} parent=5 // pred_check
        _
      $region34: #{tpu_custom_call.1} parent=5 // pred_check_branch
        %201 = sbr.rel (%p198) target = $region36
      $region35: #{tpu_custom_call.1} parent=5 // pred_region
        %s202 = ssub.s32 %s13, 1
        %p203 = scmp.lt.s32.totalorder %s23, 1
        %s204 = scalar_select %p203, %s23, 1
        %s205 = smul.addr %s204, 4
        %s206 = scalar_lea.vmem %s0, %s205
        %p207 = pneg %p58
        %p208 = pneg %p55
        %p209 = scmp.lt.s32.totalorder %s24, 1
        %s210 = scalar_select %p209, %s24, 1
        %s211 = smul.addr %s210, 4
        %s212 = smul.addr %s211, 4
        %s213 = scalar_lea.vmem %s1, %s212
        %p214 = pneg %p84
        %p215 = pneg %p81
        %p216 = pneg %p105
        %p217 = pneg %p102
        %p218 = pneg %p126
        %p219 = pneg %p123
        %p220 = pneg %p156
        %p221 = pneg %p153
        %s222 = sand.u32 %s143, 1
        %s223 = scalar_lea.sflag [#allocation5], %s222
        %s224 = sand.u32 %s143, 1
        %s225 = smul.addr %s224, 16
        %s226 = scalar_lea.vmem [#allocation4], %s225
        %p227 = scmp.lt.s32.totalorder %s23, 1
        %s228 = scalar_select %p227, %s23, 1
        %s229 = smul.addr %s228, 4
        %s230 = scalar_lea.vmem %s0, %s229
        %p231 = scmp.lt.s32.totalorder %s24, 1
        %s232 = scalar_select %p231, %s24, 1
        %s233 = smul.addr %s232, 4
        %s234 = smul.addr %s233, 4
        %s235 = scalar_lea.vmem %s1, %s234
        %s236 = smul.u32 2, %s24
        %p238 = scmp.eq.s32.totalorder %s25, 0
        // Predicated region
        $region37: #{tpu_custom_call.1} parent=35 // pred_check
          %p239 = pneg %p238
        $region38: #{tpu_custom_call.1} parent=35 // pred_check_branch
          %241 = sbr.rel (%p239) target = $region40
        $region39: #{tpu_custom_call.1} parent=35 // pred_region
          %v242 = vld [vmem:[%s230] sm:$0xf]
          %v243 = vld [vmem:[%s235] sm:$0xf]
          %v244 = vld [vmem:[%s235 + $0x4] sm:$0xf]
          %v245 = vld [vmem:[%s235 + $0x8] sm:$0xf]
          %v246 = vld [vmem:[%s235 + $0xc] sm:$0xf]
          %v251 = vunpack.c.l.b16 %v243
          %v252 = vunpack.c.l.b16 %v244
          %v253 = vunpack.c.l.b16 %v245
          %v254 = vunpack.c.l.b16 %v246
          %v255 = vpack.c.b16 %v252, %v251
          %v256 = vpack.c.b16 %v254, %v253
          %vm259 = vcmask 261120
          %v261 = vsel %vm259, %v242, 0
          %263 = vmatprep.subr.bf16.mxu0 0
          %264 = vmatpush1.bf16.msra.mxu0 %v255
          %265 = vmatprep.subr.bf16.mxu0 0
          %266 = vmatpush1.bf16.msra.mxu0 %v256
          %267 = vmatprep.subr.bf16.mxu0 0
          %268 = vmatpush1.bf16.msra.mxu0 0
          %269 = vmatprep.subr.bf16.mxu0 0
          %270 = vmatpush1.bf16.msra.mxu0 0
          %271 = vmatprep.subr.bf16.mxu0 0
          %272 = vmatpush1.bf16.msra.mxu0 0
          %273 = vmatprep.subr.bf16.mxu0 0
          %274 = vmatpush1.bf16.msra.mxu0 0
          %275 = vmatprep.subr.bf16.mxu0 0
          %276 = vmatpush1.bf16.msra.mxu0 0
          %277 = vmatprep.subr.bf16.mxu0 0
          %278 = vmatpush1.bf16.msra.mxu0 0
          %279 = vmatprep.subr.bf16.mxu0 0
          %280 = vmatpush1.bf16.msra.mxu0 0
          %281 = vmatprep.subr.bf16.mxu0 0
          %282 = vmatpush1.bf16.msra.mxu0 0
          %283 = vmatprep.subr.bf16.mxu0 0
          %284 = vmatpush1.bf16.msra.mxu0 0
          %285 = vmatprep.subr.bf16.mxu0 0
          %286 = vmatpush1.bf16.msra.mxu0 0
          %287 = vmatprep.subr.bf16.mxu0 0
          %288 = vmatpush1.bf16.msra.mxu0 0
          %289 = vmatprep.subr.bf16.mxu0 0
          %290 = vmatpush1.bf16.msra.mxu0 0
          %291 = vmatprep.subr.bf16.mxu0 0
          %292 = vmatpush1.bf16.msra.mxu0 0
          %293 = vmatprep.subr.bf16.mxu0 0
          %294 = vmatpush1.bf16.msra.mxu0 0
          %295 = vmatprep.mubr.bf16.mxu0 0
          %296 = vmatmul.mubr.bf16.gmra.mrb[0].mxu0 %v261
          %v297 = vpop.f32.mrb[0].mxu0
          %v298 = vadd.f32 0.0, %v297
          %v299 = vpop.f32.mrb[0].mxu0
          %v300 = vpop.f32.mrb[0].mxu0
          %v301 = vpop.f32.mrb[0].mxu0
          %302 = vdwg.mxu0
          %v303 = vld [vmem:[%s2] sm:$0xff]
          %v304 = vld [vmem:[%s3] sm:$0xff]
          %v305 = vsub.f32 0.0, %v298
          %307 = vrot.lane.b32.xlu0 %v305, 124
          %v308 = vpop.permute.xlu0 %307
          %311 = vrot.lane.b32.xlu0 %v298, 4
          %v312 = vpop.permute.xlu0 %311
          %vm314 = vcmask 31744
          %v315 = vsel %vm314, %v308, %v312
          %v316 = vmul.f32 %v298, %v303
          %v317 = vmul.f32 %v315, %v304
          %v318 = vadd.f32 %v316, %v317
          %v319 = vpack.c.bf16 %v318, %v318
          %vm320 = vcmask 60416
          %321 = vst.msk [vmem:[#allocation2] sm:$0xf] %vm320, %v319
          %322 = vrot.lane.b32.xlu0 %v305, 116
          %v323 = vpop.permute.xlu0 %322
          %325 = vrot.lane.b32.xlu0 %v298, 124
          %v326 = vpop.permute.xlu0 %325
          %v328 = vsel %vm314, %v323, %v326
          %330 = vrot.lane.b32.xlu0 %v303, 8
          %v331 = vpop.permute.xlu0 %330
          %v333 = vmul.f32 %v298, %v331
          %v334 = vmul.f32 %v328, %v304
          %336 = vrot.lane.b32.xlu0 %v334, 8
          %v337 = vpop.permute.xlu0 %336
          %v339 = vadd.f32 %v333, %v337
          %v340 = vpack.c.bf16 %v339, %v339
          %v342 = vunpack.c.l.b16 %v340
          %v343 = vpack.c.b16 %v342, %v342
          %344 = vrot.lane.b32.xlu0 %v343, 120
          %v345 = vpop.permute.xlu0 %344
          %s347 = scalar_lea.vmem [#allocation2], 4
          %348 = vst.msk [vmem:[%s347] sm:$0xf] %vm320, %v345
          %349 = vrot.lane.b32.xlu0 %v305, 108
          %v350 = vpop.permute.xlu0 %349
          %352 = vrot.lane.b32.xlu0 %v298, 116
          %v353 = vpop.permute.xlu0 %352
          %v355 = vsel %vm314, %v350, %v353
          %356 = vrot.lane.b32.xlu0 %v303, 16
          %v357 = vpop.permute.xlu0 %356
          %v359 = vmul.f32 %v298, %v357
          %v360 = vmul.f32 %v355, %v304
          %362 = vrot.lane.b32.xlu0 %v360, 16
          %v363 = vpop.permute.xlu0 %362
          %v365 = vadd.f32 %v359, %v363
          %v366 = vpack.c.bf16 %v365, %v365
          %v368 = vunpack.c.l.b16 %v366
          %v369 = vpack.c.b16 %v368, %v368
          %370 = vrot.lane.b32.xlu0 %v369, 112
          %v371 = vpop.permute.xlu0 %370
          %373 = vst.msk [vmem:[#allocation3] sm:$0xf] %vm320, %v371
        $region40: #{tpu_custom_call.1} parent=35 // pred_fallthru
          _
        %v374 = vld [vmem:[#allocation3] sm:$0xf]
        %v375 = vld [vmem:[#allocation2] sm:$0xf]
        %vm376 = vcmask 64512
        %v378 = vsel %vm376, %v375, 0
        %v381 = vsel %vm376, %v374, 0
        %383 = vmatprep.subr.bf16.mxu0 0
        %384 = vmatpush1.bf16.xpose.msra.mxu0 %v381
        %385 = vmatprep.subr.bf16.mxu0 0
        %386 = vmatpush1.bf16.xpose.msra.mxu0 0
        %387 = vmatprep.subr.bf16.mxu0 0
        %388 = vmatpush1.bf16.xpose.msra.mxu0 0
        %389 = vmatprep.subr.bf16.mxu0 0
        %390 = vmatpush1.bf16.xpose.msra.mxu0 0
        %391 = vmatprep.subr.bf16.mxu0 0
        %392 = vmatpush1.bf16.xpose.msra.mxu0 0
        %393 = vmatprep.subr.bf16.mxu0 0
        %394 = vmatpush1.bf16.xpose.msra.mxu0 0
        %395 = vmatprep.subr.bf16.mxu0 0
        %396 = vmatpush1.bf16.xpose.msra.mxu0 0
        %397 = vmatprep.subr.bf16.mxu0 0
        %398 = vmatpush1.bf16.xpose.msra.mxu0 0
        %399 = vmatprep.subr.bf16.mxu0 0
        %400 = vmatpush1.bf16.xpose.msra.mxu0 0
        %401 = vmatprep.subr.bf16.mxu0 0
        %402 = vmatpush1.bf16.xpose.msra.mxu0 0
        %403 = vmatprep.subr.bf16.mxu0 0
        %404 = vmatpush1.bf16.xpose.msra.mxu0 0
        %405 = vmatprep.subr.bf16.mxu0 0
        %406 = vmatpush1.bf16.xpose.msra.mxu0 0
        %407 = vmatprep.subr.bf16.mxu0 0
        %408 = vmatpush1.bf16.xpose.msra.mxu0 0
        %409 = vmatprep.subr.bf16.mxu0 0
        %410 = vmatpush1.bf16.xpose.msra.mxu0 0
        %411 = vmatprep.subr.bf16.mxu0 0
        %412 = vmatpush1.bf16.xpose.msra.mxu0 0
        %413 = vmatprep.subr.bf16.mxu0 0
        %414 = vmatpush1.bf16.xpose.msra.mxu0 0
        %415 = vmatprep.mubr.bf16.mxu0 0
        %416 = vmatmul.mubr.bf16.gmra.mrb[0].mxu0 %v378
        %v417 = vpop.f32.mrb[0].mxu0
        %v418 = vadd.f32 0.0, %v417
        %v419 = vpop.f32.mrb[0].mxu0
        %v420 = vpop.f32.mrb[0].mxu0
        %v421 = vpop.f32.mrb[0].mxu0
        %422 = vdwg.mxu0
        %v423 = vsel %vm376, %v418, -inf
        %424 = vmax.xlane.f32.xlu0 %v423
        %v425 = vpop.xlane.xlu0 %424
        %v426 = vsub.f32 %v418, %v425
        %v427 = vmul.f32 %v426, 1.442695
        %v428 = vpow.pop %v427
        %v429 = vsel %vm376, %v428, 0.0
        %430 = vadd.xlane.f32.xlu0 %v429
        %v431 = vpop.xlane.xlu0 %430
        %v432 = vrcp.pop %v431
        %v433 = vmul.f32 %v428, %v432
        %434 = vst.msk [vmem:[%s226] sm:$0xff] %vm376, %v433
        %s435 = scalar_lea.vmem [#allocation2], 4
        %v436 = vld [vmem:[%s435] sm:$0xf]
        %v438 = vsel %vm376, %v436, 0
        %440 = vmatprep.subr.bf16.mxu0 0
        %441 = vmatpush1.bf16.xpose.msra.mxu0 %v381
        %442 = vmatprep.subr.bf16.mxu0 0
        %443 = vmatpush1.bf16.xpose.msra.mxu0 0
        %444 = vmatprep.subr.bf16.mxu0 0
        %445 = vmatpush1.bf16.xpose.msra.mxu0 0
        %446 = vmatprep.subr.bf16.mxu0 0
        %447 = vmatpush1.bf16.xpose.msra.mxu0 0
        %448 = vmatprep.subr.bf16.mxu0 0
        %449 = vmatpush1.bf16.xpose.msra.mxu0 0
        %450 = vmatprep.subr.bf16.mxu0 0
        %451 = vmatpush1.bf16.xpose.msra.mxu0 0
        %452 = vmatprep.subr.bf16.mxu0 0
        %453 = vmatpush1.bf16.xpose.msra.mxu0 0
        %454 = vmatprep.subr.bf16.mxu0 0
        %455 = vmatpush1.bf16.xpose.msra.mxu0 0
        %456 = vmatprep.subr.bf16.mxu0 0
        %457 = vmatpush1.bf16.xpose.msra.mxu0 0
        %458 = vmatprep.subr.bf16.mxu0 0
        %459 = vmatpush1.bf16.xpose.msra.mxu0 0
        %460 = vmatprep.subr.bf16.mxu0 0
        %461 = vmatpush1.bf16.xpose.msra.mxu0 0
        %462 = vmatprep.subr.bf16.mxu0 0
        %463 = vmatpush1.bf16.xpose.msra.mxu0 0
        %464 = vmatprep.subr.bf16.mxu0 0
        %465 = vmatpush1.bf16.xpose.msra.mxu0 0
        %466 = vmatprep.subr.bf16.mxu0 0
        %467 = vmatpush1.bf16.xpose.msra.mxu0 0
        %468 = vmatprep.subr.bf16.mxu0 0
        %469 = vmatpush1.bf16.xpose.msra.mxu0 0
        %470 = vmatprep.subr.bf16.mxu0 0
        %471 = vmatpush1.bf16.xpose.msra.mxu0 0
        %472 = vmatprep.mubr.bf16.mxu0 0
        %473 = vmatmul.mubr.bf16.gmra.mrb[0].mxu0 %v438
        %v474 = vpop.f32.mrb[0].mxu0
        %v475 = vadd.f32 0.0, %v474
        %v476 = vpop.f32.mrb[0].mxu0
        %v477 = vpop.f32.mrb[0].mxu0
        %v478 = vpop.f32.mrb[0].mxu0
        %479 = vdwg.mxu0
        %v480 = vsel %vm376, %v475, -inf
        %481 = vmax.xlane.f32.xlu0 %v480
        %v482 = vpop.xlane.xlu0 %481
        %v483 = vsub.f32 %v475, %v482
        %v484 = vmul.f32 %v483, 1.442695
        %v485 = vpow.pop %v484
        %v486 = vsel %vm376, %v485, 0.0
        %487 = vadd.xlane.f32.xlu0 %v486
        %v488 = vpop.xlane.xlu0 %487
        %v489 = vrcp.pop %v488
        %v490 = vmul.f32 %v485, %v489
        %s491 = scalar_lea.vmem %s226, 8 [#allocation4]
        %492 = vst.msk [vmem:[%s491] sm:$0xff] %vm376, %v490
        %s493 = sand.u32 %s143, 1
        %s494 = scalar_lea.sflag [#allocation5], %s493
        %s495 = sand.u32 %s143, 1
        %s496 = smul.addr %s495, 16
        %s497 = scalar_lea.vmem [#allocation4], %s496
        // Predicated region
        $region41: #{tpu_custom_call.1} parent=35 // pred_check
          %p498 = pneg %p153
        $region42: #{tpu_custom_call.1} parent=35 // pred_check_branch
          %500 = sbr.rel (%p498) target = $region44
        $region43: #{tpu_custom_call.1} parent=35 // pred_region
          %s501 = smul.u32 2, %s24
          %s503 = ssub.s32 256, 256
          %504 = vsyncadd %s494, %s503
          %s505 = sadd.s32 %s25, %s501
          %s506 = smul.addr %s23, 4
          %s507 = sadd.s32 %s505, %s506
          %s508 = smul.addr %s507, 128
          %s509 = scalar_lea.hbm %s4, %s508
          %s510 = sshll.u32 %s497, 4
          %s511 = int_to_ptr.vmem [resolvable:$true] %s510
          %516 = dma.vmem_to_hbm [thread:$0]  %s511, 256, %s509, %s494, 128, 128, 8
        $region44: #{tpu_custom_call.1} parent=35 // pred_fallthru
          _
      $region36: #{tpu_custom_call.1} parent=5 // pred_fallthru
        _
      %p517 = scmp.le.s32.totalorder 2, %s13
      // Predicated region
      $region45: #{tpu_custom_call.1} parent=5 // pred_check
        %p518 = pneg %p517
      $region46: #{tpu_custom_call.1} parent=5 // pred_check_branch
        %520 = sbr.rel (%p518) target = $region48
      $region47: #{tpu_custom_call.1} parent=5 // pred_region
        %s521 = ssub.s32 %s13, 2
        // Predicated region
        $region49: #{tpu_custom_call.1} parent=47 // pred_check
          %p522 = pneg %p159
        $region50: #{tpu_custom_call.1} parent=47 // pred_check_branch
          %524 = sbr.rel (%p522) target = $region52
        $region51: #{tpu_custom_call.1} parent=47 // pred_region
          %s525 = sand.u32 %s144, 1
          %s526 = scalar_lea.sflag [#allocation5], %s525
          %s527 = sand.u32 %s144, 1
          %s528 = smul.addr %s527, 16
          %s529 = scalar_lea.vmem [#allocation4], %s528
          %530 = dma.done %s526, 256
        $region52: #{tpu_custom_call.1} parent=47 // pred_fallthru
          _
      $region48: #{tpu_custom_call.1} parent=5 // pred_fallthru
        _
    $region6: #{tpu_custom_call.1} parent=1 // loop_footer
      %s17 = sadd.s32 1, %s13
    $region7: #{tpu_custom_call.1} parent=1 // loop_footer_branch
      %12 = sbr.rel target = $region3
    $region8: #{tpu_custom_call.1} parent=1 // loop_exit
      _
    %531 = vsyncpa [#allocation5], 1
    %s532 = scalar_lea.sflag [#allocation5], 1
    %533 = vsyncpa %s532, 1

</llo_original>
